<compile_context>
chip_gen: v5e
topology: v5e:2x2
jax: 0.10.0
libtpu: 0.0.40
codegen_flags: <defaults>
</compile_context>

<pallas_src>
import jax
import jax.numpy as jnp
from jax.experimental import pallas as pl
from jax.experimental.pallas import tpu as pltpu

# ----------------------------- config (module defaults) ----------------------
N_INPUT = 90
N_OUTPUT = 15
HIDDEN = 32
BATCH = 2
TILE_B = 8          # sublane-aligned batch tile


# ----------------------------- kernel ----------------------------------------
def adversary_kernel(x_ref,
                     w1_ref, b1_ref,
                     w2_ref, b2_ref,
                     w3_ref, b3_ref,
                     w4_ref, b4_ref,
                     o_ref):
    """Fused 4-layer MLP + ReLU + sigmoid for one (TILE_B, n_in) batch tile."""
    x = x_ref[...]                                                   # (TB, n_in)

    h = jnp.dot(x, w1_ref[...], preferred_element_type=jnp.float32) + b1_ref[...]
    h = jnp.maximum(h, 0.0)

    h = jnp.dot(h, w2_ref[...], preferred_element_type=jnp.float32) + b2_ref[...]
    h = jnp.maximum(h, 0.0)

    h = jnp.dot(h, w3_ref[...], preferred_element_type=jnp.float32) + b3_ref[...]
    h = jnp.maximum(h, 0.0)

    logits = jnp.dot(h, w4_ref[...], preferred_element_type=jnp.float32) + b4_ref[...]
    o_ref[...] = jax.nn.sigmoid(logits)                              # (TB, n_out)


# ----------------------------- wrapper ----------------------------------------
def adversary_forward(x, params, tile_b=TILE_B):
    """x: (B, n_input) float32 -> sigmoid(MLP(x)): (B, n_output) float32."""
    B, n_in = x.shape
    n_out = params['w4'].shape[1]

    # pad batch up to a multiple of the sublane tile (8 rows for f32)
    Bp = ((B + tile_b - 1) // tile_b) * tile_b
    if Bp != B:
        x = jnp.pad(x, ((0, Bp - B), (0, 0)))

    weight_keys = ('w1', 'b1', 'w2', 'b2', 'w3', 'b3', 'w4', 'b4')
    weight_specs = [pl.BlockSpec(tuple(params[k].shape), lambda i: (0, 0))
                    for k in weight_keys]

    out = pl.pallas_call(
        adversary_kernel,
        out_shape=jax.ShapeDtypeStruct((Bp, n_out), jnp.float32),
        grid=(Bp // tile_b,),
        in_specs=[pl.BlockSpec((tile_b, n_in), lambda i: (i, 0))] + weight_specs,
        out_specs=pl.BlockSpec((tile_b, n_out), lambda i: (i, 0)),
        compiler_params=pltpu.CompilerParams(
            dimension_semantics=("parallel",)),   # v7x: shard batch tiles over 2 TCs
    )(x, *[params[k] for k in weight_keys])

    return out[:B]


# ----------------------------- reference (pure JAX) ---------------------------
def adversary_reference(x, p):
    h = jnp.maximum(x @ p['w1'] + p['b1'], 0.0)
    h = jnp.maximum(h @ p['w2'] + p['b2'], 0.0)
    h = jnp.maximum(h @ p['w3'] + p['b3'], 0.0)
    return jax.nn.sigmoid(h @ p['w4'] + p['b4'])


# ----------------------------- parameter init ---------------------------------
def init_params(key, n_input=N_INPUT, n_output=N_OUTPUT, hidden=HIDDEN):
    ks = jax.random.split(key, 8)

    def nrm(k, shape, std=0.1):
        return std * jax.random.normal(k, shape, jnp.float32)

    # weights stored (in, out) so the kernel computes x @ W (== torch Linear W.T)
    return {
        'w1': nrm(ks[0], (n_input, hidden)),
        'b1': nrm(ks[1], (1, hidden)),
        'w2': nrm(ks[2], (hidden, hidden)),
        'b2': nrm(ks[3], (1, hidden)),
        'w3': nrm(ks[4], (hidden, hidden)),
        'b3': nrm(ks[5], (1, hidden)),
        'w4': nrm(ks[6], (hidden, n_output)),
        'b4': nrm(ks[7], (1, n_output)),
    }


# ----------------------------- main --------------------------------------------
if __name__ == "__main__":
    key = jax.random.PRNGKey(0)
    pkey, xkey = jax.random.split(key)

    params = init_params(pkey)
    x = jax.random.normal(xkey, (BATCH, N_INPUT), jnp.float32)

    out = adversary_forward(x, params)
    out = jax.block_until_ready(out)

    assert out.shape == (BATCH, N_OUTPUT)
    assert bool(jnp.all(jnp.isfinite(out)))
    assert bool(jnp.all((out >= 0.0) & (out <= 1.0)))   # sigmoid range

    ref = jax.block_until_ready(adversary_reference(x, params))
    assert bool(jnp.allclose(out, ref, atol=1e-5, rtol=1e-5)), "mismatch vs reference"

    print("KERNEL_OK")
</pallas_src>

<mosaic_0001>
module attributes {stable_mosaic.version = 11 : i64} {
  func.func @adversary_kernel(%arg0: i32, %arg1: memref<8x90xf32, #tpu.memory_space<vmem>>, %arg2: memref<90x32xf32, #tpu.memory_space<vmem>>, %arg3: memref<1x32xf32, #tpu.memory_space<vmem>>, %arg4: memref<32x32xf32, #tpu.memory_space<vmem>>, %arg5: memref<1x32xf32, #tpu.memory_space<vmem>>, %arg6: memref<32x32xf32, #tpu.memory_space<vmem>>, %arg7: memref<1x32xf32, #tpu.memory_space<vmem>>, %arg8: memref<32x15xf32, #tpu.memory_space<vmem>>, %arg9: memref<1x15xf32, #tpu.memory_space<vmem>>, %arg10: memref<8x15xf32, #tpu.memory_space<vmem>>) attributes {dimension_semantics = [#tpu.dimension_semantics<parallel>], iteration_bounds = array<i64: 1>, scalar_prefetch = 0 : i64, scratch_operands = 0 : i64, tpu.core_type = #tpu.core_type<tc>, window_params = [{transform_indices = @transform_0, window_bounds = array<i64: 8, 90>}, {pipeline_mode = #tpu.pipeline_mode<synchronous>, transform_indices = @transform_1, window_bounds = array<i64: 90, 32>}, {pipeline_mode = #tpu.pipeline_mode<synchronous>, transform_indices = @transform_2, window_bounds = array<i64: 1, 32>}, {pipeline_mode = #tpu.pipeline_mode<synchronous>, transform_indices = @transform_3, window_bounds = array<i64: 32, 32>}, {pipeline_mode = #tpu.pipeline_mode<synchronous>, transform_indices = @transform_4, window_bounds = array<i64: 1, 32>}, {pipeline_mode = #tpu.pipeline_mode<synchronous>, transform_indices = @transform_5, window_bounds = array<i64: 32, 32>}, {pipeline_mode = #tpu.pipeline_mode<synchronous>, transform_indices = @transform_6, window_bounds = array<i64: 1, 32>}, {pipeline_mode = #tpu.pipeline_mode<synchronous>, transform_indices = @transform_7, window_bounds = array<i64: 32, 15>}, {pipeline_mode = #tpu.pipeline_mode<synchronous>, transform_indices = @transform_8, window_bounds = array<i64: 1, 15>}, {transform_indices = @transform_9, window_bounds = array<i64: 8, 15>}]} {
    %c0 = arith.constant 0 : index
    %c0_0 = arith.constant 0 : index
    %0 = vector.load %arg1[%c0, %c0_0] : memref<8x90xf32, #tpu.memory_space<vmem>>, vector<8x90xf32>
    %c0_1 = arith.constant 0 : index
    %c0_2 = arith.constant 0 : index
    %1 = vector.load %arg2[%c0_1, %c0_2] : memref<90x32xf32, #tpu.memory_space<vmem>>, vector<90x32xf32>
    %cst = arith.constant dense<0.000000e+00> : vector<8x32xf32>
    %2 = tpu.matmul %0, %1, %cst {dimension_numbers = #tpu.dot_dimension_numbers<[1], [0], [0], [1], [0, 0, 1, 1], [], []>} : vector<8x90xf32>, vector<90x32xf32>, vector<8x32xf32> -> vector<8x32xf32>
    %c0_3 = arith.constant 0 : index
    %c0_4 = arith.constant 0 : index
    %3 = vector.load %arg3[%c0_3, %c0_4] : memref<1x32xf32, #tpu.memory_space<vmem>>, vector<1x32xf32>
    %4 = vector.broadcast %3 : vector<1x32xf32> to vector<8x32xf32>
    %5 = arith.addf %2, %4 : vector<8x32xf32>
    %cst_5 = arith.constant 0.000000e+00 : f32
    %6 = vector.broadcast %cst_5 : f32 to vector<8x32xf32>
    %7 = arith.maximumf %5, %6 : vector<8x32xf32>
    %c0_6 = arith.constant 0 : index
    %c0_7 = arith.constant 0 : index
    %8 = vector.load %arg4[%c0_6, %c0_7] : memref<32x32xf32, #tpu.memory_space<vmem>>, vector<32x32xf32>
    %cst_8 = arith.constant dense<0.000000e+00> : vector<8x32xf32>
    %9 = tpu.matmul %7, %8, %cst_8 {dimension_numbers = #tpu.dot_dimension_numbers<[1], [0], [0], [1], [0, 0, 1, 1], [], []>} : vector<8x32xf32>, vector<32x32xf32>, vector<8x32xf32> -> vector<8x32xf32>
    %c0_9 = arith.constant 0 : index
    %c0_10 = arith.constant 0 : index
    %10 = vector.load %arg5[%c0_9, %c0_10] : memref<1x32xf32, #tpu.memory_space<vmem>>, vector<1x32xf32>
    %11 = vector.broadcast %10 : vector<1x32xf32> to vector<8x32xf32>
    %12 = arith.addf %9, %11 : vector<8x32xf32>
    %cst_11 = arith.constant 0.000000e+00 : f32
    %13 = vector.broadcast %cst_11 : f32 to vector<8x32xf32>
    %14 = arith.maximumf %12, %13 : vector<8x32xf32>
    %c0_12 = arith.constant 0 : index
    %c0_13 = arith.constant 0 : index
    %15 = vector.load %arg6[%c0_12, %c0_13] : memref<32x32xf32, #tpu.memory_space<vmem>>, vector<32x32xf32>
    %cst_14 = arith.constant dense<0.000000e+00> : vector<8x32xf32>
    %16 = tpu.matmul %14, %15, %cst_14 {dimension_numbers = #tpu.dot_dimension_numbers<[1], [0], [0], [1], [0, 0, 1, 1], [], []>} : vector<8x32xf32>, vector<32x32xf32>, vector<8x32xf32> -> vector<8x32xf32>
    %c0_15 = arith.constant 0 : index
    %c0_16 = arith.constant 0 : index
    %17 = vector.load %arg7[%c0_15, %c0_16] : memref<1x32xf32, #tpu.memory_space<vmem>>, vector<1x32xf32>
    %18 = vector.broadcast %17 : vector<1x32xf32> to vector<8x32xf32>
    %19 = arith.addf %16, %18 : vector<8x32xf32>
    %cst_17 = arith.constant 0.000000e+00 : f32
    %20 = vector.broadcast %cst_17 : f32 to vector<8x32xf32>
    %21 = arith.maximumf %19, %20 : vector<8x32xf32>
    %c0_18 = arith.constant 0 : index
    %c0_19 = arith.constant 0 : index
    %22 = vector.load %arg8[%c0_18, %c0_19] : memref<32x15xf32, #tpu.memory_space<vmem>>, vector<32x15xf32>
    %cst_20 = arith.constant dense<0.000000e+00> : vector<8x15xf32>
    %23 = tpu.matmul %21, %22, %cst_20 {dimension_numbers = #tpu.dot_dimension_numbers<[1], [0], [0], [1], [0, 0, 1, 1], [], []>} : vector<8x32xf32>, vector<32x15xf32>, vector<8x15xf32> -> vector<8x15xf32>
    %c0_21 = arith.constant 0 : index
    %c0_22 = arith.constant 0 : index
    %24 = vector.load %arg9[%c0_21, %c0_22] : memref<1x15xf32, #tpu.memory_space<vmem>>, vector<1x15xf32>
    %25 = vector.broadcast %24 : vector<1x15xf32> to vector<8x15xf32>
    %26 = arith.addf %23, %25 : vector<8x15xf32>
    %27 = arith.negf %26 : vector<8x15xf32>
    %28 = math.exp %27 : vector<8x15xf32>
    %cst_23 = arith.constant 1.000000e+00 : f32
    %29 = vector.broadcast %cst_23 : f32 to vector<8x15xf32>
    %30 = arith.addf %29, %28 : vector<8x15xf32>
    %31 = arith.divf %29, %30 : vector<8x15xf32>
    %c0_24 = arith.constant 0 : index
    %c0_25 = arith.constant 0 : index
    %32 = vector.load %arg10[%c0_24, %c0_25] : memref<8x15xf32, #tpu.memory_space<vmem>>, vector<8x15xf32>
    tpu.vector_store %arg10[%c0_24, %c0_25], %31 {strides = array<i32>} : memref<8x15xf32, #tpu.memory_space<vmem>>, vector<8x15xf32>,
    return
  }
  func.func @transform_0(%arg0: i32) -> (i32, i32) {
    %c0_i32 = arith.constant 0 : i32
    %c0_i32_0 = arith.constant 0 : i32
    return %arg0, %c0_i32 : i32, i32
  }
  func.func @transform_1(%arg0: i32) -> (i32, i32) {
    %c0_i32 = arith.constant 0 : i32
    %c0_i32_0 = arith.constant 0 : i32
    %c0_i32_1 = arith.constant 0 : i32
    return %c0_i32, %c0_i32_0 : i32, i32
  }
  func.func @transform_2(%arg0: i32) -> (i32, i32) {
    %c0_i32 = arith.constant 0 : i32
    %c0_i32_0 = arith.constant 0 : i32
    %c0_i32_1 = arith.constant 0 : i32
    return %c0_i32, %c0_i32_0 : i32, i32
  }
  func.func @transform_3(%arg0: i32) -> (i32, i32) {
    %c0_i32 = arith.constant 0 : i32
    %c0_i32_0 = arith.constant 0 : i32
    %c0_i32_1 = arith.constant 0 : i32
    return %c0_i32, %c0_i32_0 : i32, i32
  }
  func.func @transform_4(%arg0: i32) -> (i32, i32) {
    %c0_i32 = arith.constant 0 : i32
    %c0_i32_0 = arith.constant 0 : i32
    %c0_i32_1 = arith.constant 0 : i32
    return %c0_i32, %c0_i32_0 : i32, i32
  }
  func.func @transform_5(%arg0: i32) -> (i32, i32) {
    %c0_i32 = arith.constant 0 : i32
    %c0_i32_0 = arith.constant 0 : i32
    %c0_i32_1 = arith.constant 0 : i32
    return %c0_i32, %c0_i32_0 : i32, i32
  }
  func.func @transform_6(%arg0: i32) -> (i32, i32) {
    %c0_i32 = arith.constant 0 : i32
    %c0_i32_0 = arith.constant 0 : i32
    %c0_i32_1 = arith.constant 0 : i32
    return %c0_i32, %c0_i32_0 : i32, i32
  }
  func.func @transform_7(%arg0: i32) -> (i32, i32) {
    %c0_i32 = arith.constant 0 : i32
    %c0_i32_0 = arith.constant 0 : i32
    %c0_i32_1 = arith.constant 0 : i32
    return %c0_i32, %c0_i32_0 : i32, i32
  }
  func.func @transform_8(%arg0: i32) -> (i32, i32) {
    %c0_i32 = arith.constant 0 : i32
    %c0_i32_0 = arith.constant 0 : i32
    %c0_i32_1 = arith.constant 0 : i32
    return %c0_i32, %c0_i32_0 : i32, i32
  }
  func.func @transform_9(%arg0: i32) -> (i32, i32) {
    %c0_i32 = arith.constant 0 : i32
    %c0_i32_0 = arith.constant 0 : i32
    return %arg0, %c0_i32 : i32, i32
  }
}

</mosaic_0001>

<llo_original>
// kernel: tpu_custom_call.1
$region0: #{tpu_custom_call.1}
  #allocation0 [shape = 'u32[]', space=smem, size = 0x4, offset = 0x4, fixed_abs, tag = 'smem constant byte address 0x4 - core index']
  #allocation1 [shape = 'u32[72,128]{1,0:T(1,128)}', space=vmem, size = 0x9000, scoped, tag = 'internal scratch']
  %s0 = inlined_call_operand.vmem [shape: f32[8,90], index: 0, kind: input, shape index: {}]
  %s1 = inlined_call_operand.vmem [shape: f32[90,32], index: 1, kind: input, shape index: {}]
  %s2 = inlined_call_operand.vmem [shape: f32[1,32], index: 2, kind: input, shape index: {}]
  %s3 = inlined_call_operand.vmem [shape: f32[32,32], index: 3, kind: input, shape index: {}]
  %s4 = inlined_call_operand.vmem [shape: f32[1,32], index: 4, kind: input, shape index: {}]
  %s5 = inlined_call_operand.vmem [shape: f32[32,32], index: 5, kind: input, shape index: {}]
  %s6 = inlined_call_operand.vmem [shape: f32[1,32], index: 6, kind: input, shape index: {}]
  %s7 = inlined_call_operand.vmem [shape: f32[32,15], index: 7, kind: input, shape index: {}]
  %s8 = inlined_call_operand.vmem [shape: f32[1,15], index: 8, kind: input, shape index: {}]
  %s9 = inlined_call_operand.hbm [shape: f32[8,15], index: 9, kind: output, shape index: {}]
  %s10 = sld [smem:[#allocation0]]
  $region46: #{tpu_custom_call.1} parent=0
    _
  %s12 = ssub.s32 1, %s10
  %s13 = scalar_select 0, %s12, %s10
  $region1: #{tpu_custom_call.1} parent=0
    #allocation2 [shape = 'u8[4096]{0}', space=vmem, size = 0x1000, scoped, tag = 'output window, operand 0, single buffered']
    #allocation3 [shape = 's32[1]{0}', space=sflag, size = 0x4, scoped, tag = 'scoped memory for tpu_custom_call.1']
    %14 = vsyncpa [#allocation3], 0
    // Predicated region
    $region2: #{tpu_custom_call.1} parent=1 // pred_check
      _
    $region3: #{tpu_custom_call.1} parent=1 // pred_check_branch
      %16 = sbr.rel (0) target = $region5
    $region4: #{tpu_custom_call.1} parent=1 // pred_region
      _
    $region5: #{tpu_custom_call.1} parent=1 // pred_fallthru
      _
    // Predicated region
    $region6: #{tpu_custom_call.1} parent=1 // pred_check
      _
    $region7: #{tpu_custom_call.1} parent=1 // pred_check_branch
      %18 = sbr.rel (0) target = $region9
    $region8: #{tpu_custom_call.1} parent=1 // pred_region
      _
    $region9: #{tpu_custom_call.1} parent=1 // pred_fallthru
      _
    // Predicated region
    $region10: #{tpu_custom_call.1} parent=1 // pred_check
      _
    $region11: #{tpu_custom_call.1} parent=1 // pred_check_branch
      %20 = sbr.rel (0) target = $region13
    $region12: #{tpu_custom_call.1} parent=1 // pred_region
      _
    $region13: #{tpu_custom_call.1} parent=1 // pred_fallthru
      _
    // Predicated region
    $region14: #{tpu_custom_call.1} parent=1 // pred_check
      _
    $region15: #{tpu_custom_call.1} parent=1 // pred_check_branch
      %22 = sbr.rel (0) target = $region17
    $region16: #{tpu_custom_call.1} parent=1 // pred_region
      _
    $region17: #{tpu_custom_call.1} parent=1 // pred_fallthru
      _
    // Predicated region
    $region18: #{tpu_custom_call.1} parent=1 // pred_check
      _
    $region19: #{tpu_custom_call.1} parent=1 // pred_check_branch
      %24 = sbr.rel (0) target = $region21
    $region20: #{tpu_custom_call.1} parent=1 // pred_region
      _
    $region21: #{tpu_custom_call.1} parent=1 // pred_fallthru
      _
    // Predicated region
    $region22: #{tpu_custom_call.1} parent=1 // pred_check
      _
    $region23: #{tpu_custom_call.1} parent=1 // pred_check_branch
      %26 = sbr.rel (0) target = $region25
    $region24: #{tpu_custom_call.1} parent=1 // pred_region
      _
    $region25: #{tpu_custom_call.1} parent=1 // pred_fallthru
      _
    // Predicated region
    $region26: #{tpu_custom_call.1} parent=1 // pred_check
      _
    $region27: #{tpu_custom_call.1} parent=1 // pred_check_branch
      %28 = sbr.rel (0) target = $region29
    $region28: #{tpu_custom_call.1} parent=1 // pred_region
      _
    $region29: #{tpu_custom_call.1} parent=1 // pred_fallthru
      _
    // Predicated region
    $region30: #{tpu_custom_call.1} parent=1 // pred_check
      _
    $region31: #{tpu_custom_call.1} parent=1 // pred_check_branch
      %30 = sbr.rel (0) target = $region33
    $region32: #{tpu_custom_call.1} parent=1 // pred_region
      _
    $region33: #{tpu_custom_call.1} parent=1 // pred_fallthru
      _
    // Predicated region
    $region34: #{tpu_custom_call.1} parent=1 // pred_check
      _
    $region35: #{tpu_custom_call.1} parent=1 // pred_check_branch
      %32 = sbr.rel (0) target = $region37
    $region36: #{tpu_custom_call.1} parent=1 // pred_region
      _
    $region37: #{tpu_custom_call.1} parent=1 // pred_fallthru
      _
    %v33 = vld [vmem:[%s0] sm:$0xff]
    %v34 = vld [vmem:[%s1] sm:$0xff]
    %v35 = vld [vmem:[%s1 + $0x8] sm:$0xff]
    %v36 = vld [vmem:[%s1 + $0x10] sm:$0xff]
    %v37 = vld [vmem:[%s1 + $0x18] sm:$0xff]
    %v38 = vld [vmem:[%s1 + $0x20] sm:$0xff]
    %v39 = vld [vmem:[%s1 + $0x28] sm:$0xff]
    %v40 = vld [vmem:[%s1 + $0x30] sm:$0xff]
    %v41 = vld [vmem:[%s1 + $0x38] sm:$0xff]
    %v42 = vld [vmem:[%s1 + $0x40] sm:$0xff]
    %v43 = vld [vmem:[%s1 + $0x48] sm:$0xff]
    %v44 = vld [vmem:[%s1 + $0x50] sm:$0xff]
    %v45 = vld [vmem:[%s1 + $0x58] sm:$0x3]
    %v46 = vld [vmem:[%s2] sm:$0x1]
    %v48 = vperm.slane %v46, 0
    %vm50 = vcmask 736256
    %v52 = vsel %vm50, %v33, 0
    %vm54 = vcmask 1041408
    %v56 = vsel %vm54, %v45, 0
    %58 = vmatpush.msra.mxu0 0.0
    %59 = vmatpush.msra.mxu0 0.0
    %60 = vmatpush.msra.mxu0 0.0
    %61 = vmatpush.msra.mxu0 0.0
    %62 = vmatpush.msra.mxu0 %v56
    %63 = vmatpush.msra.mxu0 %v44
    %64 = vmatpush.msra.mxu0 %v43
    %65 = vmatpush.msra.mxu0 %v42
    %66 = vmatpush.msra.mxu0 %v41
    %67 = vmatpush.msra.mxu0 %v40
    %68 = vmatpush.msra.mxu0 %v39
    %69 = vmatpush.msra.mxu0 %v38
    %70 = vmatpush.msra.mxu0 %v37
    %71 = vmatpush.msra.mxu0 %v36
    %72 = vmatpush.msra.mxu0 %v35
    %73 = vmatpush.msra.mxu0 %v34
    %74 = vmatmul.f32.gmra.mxu0 %v52
    %v75 = vpop.f32.mrf.mxu0
    %v76 = vadd.f32 %v48, %v75
    %77 = vdwg.mxu0
    %v78 = vmax.f32 %v76, 0.0
    %v79 = vld [vmem:[%s3] sm:$0xff]
    %v80 = vld [vmem:[%s3 + $0x8] sm:$0xff]
    %v81 = vld [vmem:[%s3 + $0x10] sm:$0xff]
    %v82 = vld [vmem:[%s3 + $0x18] sm:$0xff]
    %v83 = vld [vmem:[%s4] sm:$0x1]
    %v85 = vperm.slane %v83, 0
    %vm87 = vcmask 261120
    %v89 = vsel %vm87, %v78, 0
    %91 = vmatpush.msra.mxu0 0.0
    %92 = vmatpush.msra.mxu0 0.0
    %93 = vmatpush.msra.mxu0 0.0
    %94 = vmatpush.msra.mxu0 0.0
    %95 = vmatpush.msra.mxu0 0.0
    %96 = vmatpush.msra.mxu0 0.0
    %97 = vmatpush.msra.mxu0 0.0
    %98 = vmatpush.msra.mxu0 0.0
    %99 = vmatpush.msra.mxu0 0.0
    %100 = vmatpush.msra.mxu0 0.0
    %101 = vmatpush.msra.mxu0 0.0
    %102 = vmatpush.msra.mxu0 0.0
    %103 = vmatpush.msra.mxu0 %v82
    %104 = vmatpush.msra.mxu0 %v81
    %105 = vmatpush.msra.mxu0 %v80
    %106 = vmatpush.msra.mxu0 %v79
    %107 = vmatmul.f32.gmra.mxu0 %v89
    %v108 = vpop.f32.mrf.mxu0
    %v109 = vadd.f32 %v85, %v108
    %110 = vdwg.mxu0
    %v111 = vmax.f32 %v109, 0.0
    %v112 = vld [vmem:[%s5] sm:$0xff]
    %v113 = vld [vmem:[%s5 + $0x8] sm:$0xff]
    %v114 = vld [vmem:[%s5 + $0x10] sm:$0xff]
    %v115 = vld [vmem:[%s5 + $0x18] sm:$0xff]
    %v116 = vld [vmem:[%s6] sm:$0x1]
    %v118 = vperm.slane %v116, 0
    %v121 = vsel %vm87, %v111, 0
    %123 = vmatpush.msra.mxu0 0.0
    %124 = vmatpush.msra.mxu0 0.0
    %125 = vmatpush.msra.mxu0 0.0
    %126 = vmatpush.msra.mxu0 0.0
    %127 = vmatpush.msra.mxu0 0.0
    %128 = vmatpush.msra.mxu0 0.0
    %129 = vmatpush.msra.mxu0 0.0
    %130 = vmatpush.msra.mxu0 0.0
    %131 = vmatpush.msra.mxu0 0.0
    %132 = vmatpush.msra.mxu0 0.0
    %133 = vmatpush.msra.mxu0 0.0
    %134 = vmatpush.msra.mxu0 0.0
    %135 = vmatpush.msra.mxu0 %v115
    %136 = vmatpush.msra.mxu0 %v114
    %137 = vmatpush.msra.mxu0 %v113
    %138 = vmatpush.msra.mxu0 %v112
    %139 = vmatmul.f32.gmra.mxu0 %v121
    %v140 = vpop.f32.mrf.mxu0
    %v141 = vadd.f32 %v118, %v140
    %142 = vdwg.mxu0
    %v143 = vmax.f32 %v141, 0.0
    %v144 = vld [vmem:[%s7] sm:$0xff]
    %v145 = vld [vmem:[%s7 + $0x8] sm:$0xff]
    %v146 = vld [vmem:[%s7 + $0x10] sm:$0xff]
    %v147 = vld [vmem:[%s7 + $0x18] sm:$0xff]
    %v148 = vld [vmem:[%s8] sm:$0x1]
    %v150 = vperm.slane %v148, 0
    %v153 = vsel %vm87, %v143, 0
    %155 = vmatpush.msra.mxu0 0.0
    %156 = vmatpush.msra.mxu0 0.0
    %157 = vmatpush.msra.mxu0 0.0
    %158 = vmatpush.msra.mxu0 0.0
    %159 = vmatpush.msra.mxu0 0.0
    %160 = vmatpush.msra.mxu0 0.0
    %161 = vmatpush.msra.mxu0 0.0
    %162 = vmatpush.msra.mxu0 0.0
    %163 = vmatpush.msra.mxu0 0.0
    %164 = vmatpush.msra.mxu0 0.0
    %165 = vmatpush.msra.mxu0 0.0
    %166 = vmatpush.msra.mxu0 0.0
    %167 = vmatpush.msra.mxu0 %v147
    %168 = vmatpush.msra.mxu0 %v146
    %169 = vmatpush.msra.mxu0 %v145
    %170 = vmatpush.msra.mxu0 %v144
    %171 = vmatmul.f32.gmra.mxu0 %v153
    %v172 = vpop.f32.mrf.mxu0
    %v173 = vadd.f32 %v150, %v172
    %174 = vdwg.mxu0
    %v175 = vxor.u32 %v173, 2147483648
    %v176 = vmul.f32 %v175, 1.442695
    %v177 = vpow.pop %v176
    %v178 = vadd.f32 %v177, 1.0
    %v179 = vrcp.pop %v178
    %v180 = vmul.f32 %v178, %v179
    %v181 = vsub.f32 1.0, %v180
    %v182 = vmul.f32 %v179, %v181
    %v183 = vadd.f32 %v179, %v182
    %vm184 = vweird.f32 %v178
    %vm185 = vweird.f32 %v179
    %vm186 = vmor %vm184, %vm185
    %v187 = vsel %vm186, %v179, %v183
    %v188 = vand.u32 2147483647, %v178
    %vm189 = vcmp.eq.f32.partialorder %v188, 8.507059e+37
    %v190 = vand.u32 %v178, 2147483648
    %v191 = vor.u32 1.1754944e-38, %v190
    %v192 = vsel %vm189, %v191, %v187
    %v193 = vmul.f32 1.0, %v192
    %vm194 = vcmask 121856
    %195 = vst.msk [vmem:[#allocation2] sm:$0xff] %vm194, %v193
    // Predicated region
    $region38: #{tpu_custom_call.1} parent=1 // pred_check
      _
    $region39: #{tpu_custom_call.1} parent=1 // pred_check_branch
      %197 = sbr.rel (0) target = $region41
    $region40: #{tpu_custom_call.1} parent=1 // pred_region
      %199 = vsyncadd [#allocation3], 0
      %s201 = sshll.u32 [#allocation2], 4
      %s202 = int_to_ptr.vmem [resolvable:$true] %s201
      %s203 = sshll.u32 %s9, 4
      %s204 = int_to_ptr.hbm [resolvable:$true] %s203
      %206 = dma.vmem_to_hbm [thread:$0]  %s202, 128, %s204, [#allocation3]
    $region41: #{tpu_custom_call.1} parent=1 // pred_fallthru
      _
    // Predicated region
    $region42: #{tpu_custom_call.1} parent=1 // pred_check
      _
    $region43: #{tpu_custom_call.1} parent=1 // pred_check_branch
      %208 = sbr.rel (0) target = $region45
    $region44: #{tpu_custom_call.1} parent=1 // pred_region
      %210 = dma.done [#allocation3], 128
    $region45: #{tpu_custom_call.1} parent=1 // pred_fallthru
      _
    %211 = vsyncpa [#allocation3], 1

</llo_original>
